<compile_context>
chip_gen: v5e
topology: v5e:2x2
jax: 0.10.0
libtpu: 0.0.40
codegen_flags: <defaults>
</compile_context>

<pallas_src>
import numpy as np
import jax
import jax.numpy as jnp
from jax.experimental import pallas as pl
from jax.experimental.pallas import tpu as pltpu


def _expert_kernel(eid_ref, x_ref, w1_ref, b1_ref, w2_ref, b2_ref, o_ref, acc_ref):
    """One grid step == one (row-block, hidden-chunk) pair.

    eid_ref: (n_blocks,) int32 in SMEM (scalar prefetch; used by index_maps)
    x_ref  : (TM, d_model)        token tile for this row block
    w1_ref : (1, d_model, TK)     W1 pre-transposed, hidden chunk k
    b1_ref : (1, 1, TK)
    w2_ref : (1, TK, d_model)     W2 pre-transposed, hidden chunk k
    b2_ref : (1, 1, d_model)
    o_ref  : (TM, d_model)
    acc_ref: (TM, d_model) f32 scratch accumulator
    """
    del eid_ref  # only consumed by the index_maps
    k = pl.program_id(1)

    @pl.when(k == 0)
    def _():
        acc_ref[...] = jnp.zeros_like(acc_ref)

    x = x_ref[...]                                   # (TM, d_model)
    w1c = w1_ref[0]                                  # (d_model, TK)
    w2c = w2_ref[0]                                  # (TK, d_model)

    # h_chunk = x @ W1[:, chunk] + b1[chunk]
    h = jnp.dot(x, w1c, preferred_element_type=jnp.float32) + b1_ref[0]
    h = jax.nn.gelu(h, approximate=True)             # (TM, TK)

    # accumulate the partial second matmul for this hidden chunk
    acc_ref[...] += jnp.dot(h.astype(w2c.dtype), w2c,
                            preferred_element_type=jnp.float32)

    @pl.when(k == pl.num_programs(1) - 1)
    def _():
        o_ref[...] = (acc_ref[...] + b2_ref[0]).astype(o_ref.dtype)


def _vmem_footprint(tk, d_model, tm, in_bytes, w_bytes, out_bytes):
    """Rough live-VMEM estimate: double-buffered streams + resident f32 acc."""
    x_tile = tm * d_model * in_bytes
    w1_tile = d_model * tk * w_bytes
    b1_tile = tk * w_bytes
    w2_tile = tk * d_model * w_bytes
    b2_tile = d_model * w_bytes
    out_tile = tm * d_model * out_bytes
    acc = tm * d_model * 4
    return 2 * (x_tile + w1_tile + b1_tile + w2_tile + b2_tile + out_tile) + acc


def _pick_hidden_chunk(d_hidden, d_model, tm, in_bytes, w_bytes, out_bytes,
                       budget_bytes):
    """Largest hidden chunk (multiple of 128 dividing d_hidden) under budget."""
    if d_hidden % 128 == 0:
        cands = [c for c in range(d_hidden, 0, -128) if d_hidden % c == 0]
    else:
        cands = [d_hidden]  # lane dim must equal the full array dim then
    for tk in cands:
        if _vmem_footprint(tk, d_model, tm, in_bytes, w_bytes, out_bytes) <= budget_bytes:
            return tk
    return cands[-1]


def expert_forward(inp, fwd_expert_count, w1, b1, w2, b2,
                   *, tm=128, hidden_chunk=None,
                   vmem_budget_bytes=40 << 20):
    """_Expert.forward.

    inp : (total_tokens, d_model), tokens sorted by expert id.
    fwd_expert_count : host-side int array (as in FastMoE's CPU tensor).
    w1 : (num_expert, d_hidden, d_model), b1 : (num_expert, d_hidden)
    w2 : (num_expert, d_model, d_hidden), b2 : (num_expert, d_model)
    """
    counts = np.asarray(fwd_expert_count, dtype=np.int64)
    num_expert, d_hidden, d_model = w1.shape
    total_tokens = int(counts.sum())
    if total_tokens == 0:
        return jnp.zeros((0, d_model), dtype=inp.dtype)

    # ---- host-side (numpy) grouped-block bookkeeping ----------------------
    blocks_per_expert = -(-counts // tm)                     # ceil(count / tm)
    n_blocks = int(blocks_per_expert.sum())
    total_pad = n_blocks * tm

    offsets = np.concatenate([[0], np.cumsum(counts)])
    pad_offsets = np.concatenate([[0], np.cumsum(blocks_per_expert * tm)])

    expert_ids = np.repeat(np.arange(num_expert, dtype=np.int32),
                           blocks_per_expert.astype(np.int64))   # (n_blocks,)

    gather_idx = np.zeros(total_pad, dtype=np.int32)  # pad rows read row 0 (dropped)
    inv_idx = np.zeros(total_tokens, dtype=np.int32)
    for e in range(num_expert):
        c = int(counts[e])
        if c == 0:
            continue
        src = np.arange(int(offsets[e]), int(offsets[e + 1]), dtype=np.int32)
        dst = np.arange(int(pad_offsets[e]), int(pad_offsets[e]) + c, dtype=np.int32)
        gather_idx[dst] = src
        inv_idx[src] = dst

    # single device gather instead of a per-expert .at[].set() loop
    x_pad = jnp.take(inp, jnp.asarray(gather_idx), axis=0)        # (total_pad, d_model)

    # pre-transpose weights once -> MXU-native (m,k) x (k,n), no in-kernel XLU
    w1_t = jnp.swapaxes(w1, 1, 2)                                 # (E, d_model, d_hidden)
    w2_t = jnp.swapaxes(w2, 1, 2)                                 # (E, d_hidden, d_model)
    b1_r = jnp.reshape(b1, (num_expert, 1, d_hidden))
    b2_r = jnp.reshape(b2, (num_expert, 1, d_model))

    in_bytes = jnp.dtype(inp.dtype).itemsize
    w_bytes = jnp.dtype(w1.dtype).itemsize
    out_bytes = in_bytes

    if hidden_chunk is None:
        tk = _pick_hidden_chunk(d_hidden, d_model, tm, in_bytes, w_bytes,
                                out_bytes, vmem_budget_bytes)
    else:
        tk = int(hidden_chunk)
        assert d_hidden % tk == 0 and (tk % 128 == 0 or tk == d_hidden), (
            "hidden_chunk must divide d_hidden and be a multiple of 128 "
            "(or the full d_hidden)")
    n_k = d_hidden // tk

    fp = _vmem_footprint(tk, d_model, tm, in_bytes, w_bytes, out_bytes)
    vmem_limit_bytes = int(max(32 << 20, fp * 5 // 4 + (2 << 20)))

    out_pad = pl.pallas_call(
        _expert_kernel,
        out_shape=jax.ShapeDtypeStruct((total_pad, d_model), inp.dtype),
        grid_spec=pltpu.PrefetchScalarGridSpec(
            num_scalar_prefetch=1,                 # expert_ids -> SMEM
            grid=(n_blocks, n_k),
            in_specs=[
                # token row block (resident across the hidden axis)
                pl.BlockSpec((tm, d_model), lambda i, k, eid: (i, 0)),
                # W1^T hidden chunk for this block's expert
                pl.BlockSpec((1, d_model, tk), lambda i, k, eid: (eid[i], 0, k)),
                pl.BlockSpec((1, 1, tk), lambda i, k, eid: (eid[i], 0, k)),
                # W2^T hidden chunk for this block's expert
                pl.BlockSpec((1, tk, d_model), lambda i, k, eid: (eid[i], k, 0)),
                pl.BlockSpec((1, 1, d_model), lambda i, k, eid: (eid[i], 0, 0)),
            ],
            out_specs=pl.BlockSpec((tm, d_model), lambda i, k, eid: (i, 0)),
            scratch_shapes=[pltpu.VMEM((tm, d_model), jnp.float32)],
        ),
        compiler_params=pltpu.CompilerParams(
            dimension_semantics=("parallel", "arbitrary"),
            vmem_limit_bytes=vmem_limit_bytes,
        ),
    )(jnp.asarray(expert_ids), x_pad, w1_t, b1_r, w2_t, b2_r)

    # single device gather drops the padded rows and restores token order
    return jnp.take(out_pad, jnp.asarray(inv_idx), axis=0)


def _reference(inp, fwd_expert_count, w1, b1, w2, b2):
    counts = np.asarray(fwd_expert_count, dtype=np.int64)
    offsets = np.concatenate([[0], np.cumsum(counts)])
    outs = []
    for e in range(w1.shape[0]):
        seg = inp[int(offsets[e]):int(offsets[e + 1])]
        h = seg @ w1[e].T + b1[e]
        h = jax.nn.gelu(h, approximate=True)
        outs.append(h @ w2[e].T + b2[e])
    return jnp.concatenate(outs, axis=0)


if __name__ == "__main__":
    num_expert = 3
    d_model = 128
    d_hidden = 256
    # host-side counts, including an expert with zero tokens
    fwd_expert_count = np.array([5, 0, 3], dtype=np.int64)
    total_tokens = int(fwd_expert_count.sum())

    key = jax.random.PRNGKey(0)
    k_inp, k_w1, k_b1, k_w2, k_b2 = jax.random.split(key, 5)

    inp = jax.random.normal(k_inp, (total_tokens, d_model), dtype=jnp.float32)
    # FMoELinear weight shape: (num_expert, out_features, in_features)
    w1 = jax.random.normal(k_w1, (num_expert, d_hidden, d_model),
                           dtype=jnp.float32) * (1.0 / np.sqrt(d_model))
    b1 = jax.random.normal(k_b1, (num_expert, d_hidden), dtype=jnp.float32) * 0.01
    w2 = jax.random.normal(k_w2, (num_expert, d_model, d_hidden),
                           dtype=jnp.float32) * (1.0 / np.sqrt(d_hidden))
    b2 = jax.random.normal(k_b2, (num_expert, d_model), dtype=jnp.float32) * 0.01

    # hidden_chunk=128 -> two hidden chunks: exercises the fused
    # accumulate / pl.when init/finalize path as well.
    out = expert_forward(inp, fwd_expert_count, w1, b1, w2, b2, hidden_chunk=128)
    out = jax.block_until_ready(out)

    ref = _reference(inp, fwd_expert_count, w1, b1, w2, b2)
    np.testing.assert_allclose(np.asarray(out), np.asarray(ref),
                               rtol=2e-5, atol=2e-5)
    print("KERNEL_OK")
</pallas_src>

<mosaic_0001>
module attributes {stable_mosaic.version = 11 : i64} {
  func.func @_expert_kernel(%arg0: i32, %arg1: i32, %arg2: memref<2xi32, #tpu.memory_space<smem>>, %arg3: memref<128x128xf32, #tpu.memory_space<vmem>>, %arg4: memref<1x128x128xf32, #tpu.memory_space<vmem>>, %arg5: memref<1x1x128xf32, #tpu.memory_space<vmem>>, %arg6: memref<1x128x128xf32, #tpu.memory_space<vmem>>, %arg7: memref<1x1x128xf32, #tpu.memory_space<vmem>>, %arg8: memref<128x128xf32, #tpu.memory_space<vmem>>, %arg9: memref<128x128xf32, #tpu.memory_space<vmem>>) attributes {dimension_semantics = [#tpu.dimension_semantics<parallel>, #tpu.dimension_semantics<arbitrary>], iteration_bounds = array<i64: 2, 2>, scalar_prefetch = 1 : i64, scratch_operands = 1 : i64, tpu.core_type = #tpu.core_type<tc>, window_params = [{transform_indices = @transform_0, window_bounds = array<i64: 128, 128>}, {transform_indices = @transform_1, window_bounds = array<i64: 1, 128, 128>}, {transform_indices = @transform_2, window_bounds = array<i64: 1, 1, 128>}, {transform_indices = @transform_3, window_bounds = array<i64: 1, 128, 128>}, {transform_indices = @transform_4, window_bounds = array<i64: 1, 1, 128>}, {transform_indices = @transform_5, window_bounds = array<i64: 128, 128>}]} {
    %c0_i32 = arith.constant 0 : i32
    %0 = arith.cmpi eq, %arg1, %c0_i32 : i32
    %1 = arith.extui %0 : i1 to i32
    %c0_i32_0 = arith.constant 0 : i32
    %2 = arith.cmpi ne, %1, %c0_i32_0 : i32
    scf.if %2 {
      %cst_21 = arith.constant 0.000000e+00 : f32
      %33 = vector.broadcast %cst_21 : f32 to vector<128x128xf32>
      %c0_22 = arith.constant 0 : index
      %c0_23 = arith.constant 0 : index
      %34 = vector.load %arg9[%c0_22, %c0_23] : memref<128x128xf32, #tpu.memory_space<vmem>>, vector<128x128xf32>
      tpu.vector_store %arg9[%c0_22, %c0_23], %33 {strides = array<i32>} : memref<128x128xf32, #tpu.memory_space<vmem>>, vector<128x128xf32>,
    } else {
    }
    %c0 = arith.constant 0 : index
    %c0_1 = arith.constant 0 : index
    %3 = vector.load %arg3[%c0, %c0_1] : memref<128x128xf32, #tpu.memory_space<vmem>>, vector<128x128xf32>
    %c0_2 = arith.constant 0 : index
    %c0_3 = arith.constant 0 : index
    %c0_4 = arith.constant 0 : index
    %4 = vector.load %arg4[%c0_2, %c0_3, %c0_4] : memref<1x128x128xf32, #tpu.memory_space<vmem>>, vector<1x128x128xf32>
    %5 = vector.shape_cast %4 : vector<1x128x128xf32> to vector<128x128xf32>
    %c0_5 = arith.constant 0 : index
    %c0_6 = arith.constant 0 : index
    %c0_7 = arith.constant 0 : index
    %6 = vector.load %arg6[%c0_5, %c0_6, %c0_7] : memref<1x128x128xf32, #tpu.memory_space<vmem>>, vector<1x128x128xf32>
    %7 = vector.shape_cast %6 : vector<1x128x128xf32> to vector<128x128xf32>
    %cst = arith.constant dense<0.000000e+00> : vector<128x128xf32>
    %8 = tpu.matmul %3, %5, %cst {dimension_numbers = #tpu.dot_dimension_numbers<[1], [0], [0], [1], [0, 0, 1, 1], [], []>} : vector<128x128xf32>, vector<128x128xf32>, vector<128x128xf32> -> vector<128x128xf32>
    %c0_8 = arith.constant 0 : index
    %c0_9 = arith.constant 0 : index
    %c0_10 = arith.constant 0 : index
    %9 = vector.load %arg5[%c0_8, %c0_9, %c0_10] : memref<1x1x128xf32, #tpu.memory_space<vmem>>, vector<1x1x128xf32>
    %10 = vector.shape_cast %9 : vector<1x1x128xf32> to vector<1x128xf32>
    %11 = vector.broadcast %10 : vector<1x128xf32> to vector<128x128xf32>
    %12 = arith.addf %8, %11 : vector<128x128xf32>
    %13 = arith.mulf %12, %12 : vector<128x128xf32>
    %14 = arith.mulf %12, %13 : vector<128x128xf32>
    %cst_11 = arith.constant 4.471500e-02 : f32
    %15 = vector.broadcast %cst_11 : f32 to vector<128x128xf32>
    %16 = arith.mulf %15, %14 : vector<128x128xf32>
    %17 = arith.addf %12, %16 : vector<128x128xf32>
    %cst_12 = arith.constant 0.797884583 : f32
    %18 = vector.broadcast %cst_12 : f32 to vector<128x128xf32>
    %19 = arith.mulf %18, %17 : vector<128x128xf32>
    %20 = math.tanh %19 : vector<128x128xf32>
    %cst_13 = arith.constant 1.000000e+00 : f32
    %21 = vector.broadcast %cst_13 : f32 to vector<128x128xf32>
    %22 = arith.addf %21, %20 : vector<128x128xf32>
    %cst_14 = arith.constant 5.000000e-01 : f32
    %23 = vector.broadcast %cst_14 : f32 to vector<128x128xf32>
    %24 = arith.mulf %23, %22 : vector<128x128xf32>
    %25 = arith.mulf %12, %24 : vector<128x128xf32>
    %c0_15 = arith.constant 0 : index
    %c0_16 = arith.constant 0 : index
    %26 = vector.load %arg9[%c0_15, %c0_16] : memref<128x128xf32, #tpu.memory_space<vmem>>, vector<128x128xf32>
    %cst_17 = arith.constant dense<0.000000e+00> : vector<128x128xf32>
    %27 = tpu.matmul %25, %7, %cst_17 {dimension_numbers = #tpu.dot_dimension_numbers<[1], [0], [0], [1], [0, 0, 1, 1], [], []>} : vector<128x128xf32>, vector<128x128xf32>, vector<128x128xf32> -> vector<128x128xf32>
    %28 = arith.addf %26, %27 : vector<128x128xf32>
    %c0_18 = arith.constant 0 : index
    %c0_19 = arith.constant 0 : index
    %29 = vector.load %arg9[%c0_18, %c0_19] : memref<128x128xf32, #tpu.memory_space<vmem>>, vector<128x128xf32>
    tpu.vector_store %arg9[%c0_18, %c0_19], %28 {strides = array<i32>} : memref<128x128xf32, #tpu.memory_space<vmem>>, vector<128x128xf32>,
    %c1_i32 = arith.constant 1 : i32
    %30 = arith.cmpi eq, %arg1, %c1_i32 : i32
    %31 = arith.extui %30 : i1 to i32
    %c0_i32_20 = arith.constant 0 : i32
    %32 = arith.cmpi ne, %31, %c0_i32_20 : i32
    scf.if %32 {
      %c0_21 = arith.constant 0 : index
      %c0_22 = arith.constant 0 : index
      %33 = vector.load %arg9[%c0_21, %c0_22] : memref<128x128xf32, #tpu.memory_space<vmem>>, vector<128x128xf32>
      %c0_23 = arith.constant 0 : index
      %c0_24 = arith.constant 0 : index
      %c0_25 = arith.constant 0 : index
      %34 = vector.load %arg7[%c0_23, %c0_24, %c0_25] : memref<1x1x128xf32, #tpu.memory_space<vmem>>, vector<1x1x128xf32>
      %35 = vector.shape_cast %34 : vector<1x1x128xf32> to vector<1x128xf32>
      %36 = vector.broadcast %35 : vector<1x128xf32> to vector<128x128xf32>
      %37 = arith.addf %33, %36 : vector<128x128xf32>
      %c0_26 = arith.constant 0 : index
      %c0_27 = arith.constant 0 : index
      %38 = vector.load %arg8[%c0_26, %c0_27] : memref<128x128xf32, #tpu.memory_space<vmem>>, vector<128x128xf32>
      tpu.vector_store %arg8[%c0_26, %c0_27], %37 {strides = array<i32>} : memref<128x128xf32, #tpu.memory_space<vmem>>, vector<128x128xf32>,
    } else {
    }
    return
  }
  func.func @transform_0(%arg0: i32, %arg1: i32, %arg2: memref<2xi32, #tpu.memory_space<smem>>) -> (i32, i32) {
    %c0_i32 = arith.constant 0 : i32
    %c0_i32_0 = arith.constant 0 : i32
    return %arg0, %c0_i32 : i32, i32
  }
  func.func @transform_1(%arg0: i32, %arg1: i32, %arg2: memref<2xi32, #tpu.memory_space<smem>>) -> (i32, i32, i32) {
    %0 = arith.index_cast %arg0 : i32 to index
    %1 = memref.load %arg2[%0] : memref<2xi32, #tpu.memory_space<smem>>
    %c0_i32 = arith.constant 0 : i32
    %c0_i32_0 = arith.constant 0 : i32
    return %1, %c0_i32, %arg1 : i32, i32, i32
  }
  func.func @transform_2(%arg0: i32, %arg1: i32, %arg2: memref<2xi32, #tpu.memory_space<smem>>) -> (i32, i32, i32) {
    %0 = arith.index_cast %arg0 : i32 to index
    %1 = memref.load %arg2[%0] : memref<2xi32, #tpu.memory_space<smem>>
    %c0_i32 = arith.constant 0 : i32
    %c0_i32_0 = arith.constant 0 : i32
    return %1, %c0_i32, %arg1 : i32, i32, i32
  }
  func.func @transform_3(%arg0: i32, %arg1: i32, %arg2: memref<2xi32, #tpu.memory_space<smem>>) -> (i32, i32, i32) {
    %0 = arith.index_cast %arg0 : i32 to index
    %1 = memref.load %arg2[%0] : memref<2xi32, #tpu.memory_space<smem>>
    %c0_i32 = arith.constant 0 : i32
    %c0_i32_0 = arith.constant 0 : i32
    return %1, %arg1, %c0_i32 : i32, i32, i32
  }
  func.func @transform_4(%arg0: i32, %arg1: i32, %arg2: memref<2xi32, #tpu.memory_space<smem>>) -> (i32, i32, i32) {
    %0 = arith.index_cast %arg0 : i32 to index
    %1 = memref.load %arg2[%0] : memref<2xi32, #tpu.memory_space<smem>>
    %c0_i32 = arith.constant 0 : i32
    %c0_i32_0 = arith.constant 0 : i32
    %c0_i32_1 = arith.constant 0 : i32
    return %1, %c0_i32, %c0_i32_0 : i32, i32, i32
  }
  func.func @transform_5(%arg0: i32, %arg1: i32, %arg2: memref<2xi32, #tpu.memory_space<smem>>) -> (i32, i32) {
    %c0_i32 = arith.constant 0 : i32
    %c0_i32_0 = arith.constant 0 : i32
    return %arg0, %c0_i32 : i32, i32
  }
}

</mosaic_0001>

<llo_original>
// kernel: tpu_custom_call.1
$region0: #{tpu_custom_call.1}
  #allocation0 [shape = 'u32[]', space=smem, size = 0x4, offset = 0x4, fixed_abs, tag = 'smem constant byte address 0x4 - core index']
  #allocation1 [shape = 'u32[72,128]{1,0:T(1,128)}', space=vmem, size = 0x9000, scoped, tag = 'internal scratch']
  #allocation2 [shape = 'f32[128,128]{1,0:T(8,128)}', space=vmem, size = 0x10000, scoped, tag = 'scratch operand']
  #allocation3 [shape = 's32[1]{0}', space=sflag, size = 0x4, scoped, tag = 'scoped memory for tpu_custom_call.1']
  #allocation4 [shape = 'u8[512]{0}', space=smem, size = 0x200, scoped, tag = 'prefetched SMEM operand 0']
  %s0 = inlined_call_operand.hbm [shape: s32[2], index: 0, kind: input, shape index: {}]
  %s1 = inlined_call_operand.hbm [shape: f32[256,128], index: 1, kind: input, shape index: {}]
  %s2 = inlined_call_operand.hbm [shape: f32[3,128,256], index: 2, kind: input, shape index: {}]
  %s3 = inlined_call_operand.hbm [shape: f32[3,1,256], index: 3, kind: input, shape index: {}]
  %s4 = inlined_call_operand.hbm [shape: f32[3,256,128], index: 4, kind: input, shape index: {}]
  %s5 = inlined_call_operand.vmem [shape: f32[3,1,128], index: 5, kind: input, shape index: {}]
  %s6 = inlined_call_operand.hbm [shape: f32[256,128], index: 6, kind: output, shape index: {}]
  %s7 = sld [smem:[#allocation0]]
  $region77: #{tpu_custom_call.1} parent=0
    _
  %s9 = ssub.s32 1, %s7
  %s10 = scalar_select 0, %s9, %s7
  %s12 = sshll.u32 %s0, 4
  %s13 = int_to_ptr.hbm [resolvable:$true] %s12
  %15 = dma.hbm_to_smem %s13, 16, [#allocation4], [#allocation3]
  %17 = dma.done [#allocation3], 16
  %18 = sfence
  $region1: #{tpu_custom_call.1} parent=0
    #allocation5 [shape = 'u8[131072]{0}', space=vmem, size = 0x20000, scoped, tag = 'input window, operand 1']
    #allocation6 [shape = 's32[2]{0}', space=sflag, size = 0x8, scoped, tag = 'scoped memory for tpu_custom_call.1']
    #allocation7 [shape = 's32[2]{0}', space=sflag, size = 0x8, scoped, tag = 'scoped memory for tpu_custom_call.1']
    #allocation8 [shape = 'u8[131072]{0}', space=vmem, size = 0x20000, scoped, tag = 'input window, operand 2']
    #allocation9 [shape = 's32[2]{0}', space=sflag, size = 0x8, scoped, tag = 'scoped memory for tpu_custom_call.1']
    #allocation10 [shape = 'u8[1024]{0}', space=vmem, size = 0x400, scoped, tag = 'input window, operand 3']
    #allocation11 [shape = 'u8[131072]{0}', space=vmem, size = 0x20000, scoped, tag = 'input window, operand 4']
    #allocation12 [shape = 's32[2]{0}', space=sflag, size = 0x8, scoped, tag = 'scoped memory for tpu_custom_call.1']
    #allocation13 [shape = 'u8[131072]{0}', space=vmem, size = 0x20000, scoped, tag = 'output window, operand 0']
    %19 = vsyncpa [#allocation6], 0
    %s20 = scalar_lea.sflag [#allocation6], 1
    %21 = vsyncpa %s20, 0
    %22 = vsyncpa [#allocation9], 0
    %s23 = scalar_lea.sflag [#allocation9], 1
    %24 = vsyncpa %s23, 0
    %25 = vsyncpa [#allocation12], 0
    %s26 = scalar_lea.sflag [#allocation12], 1
    %27 = vsyncpa %s26, 0
    %28 = vsyncpa [#allocation7], 0
    %s29 = scalar_lea.sflag [#allocation7], 1
    %30 = vsyncpa %s29, 0
    loop: start=0, step=1, limit=6
    $region2: #{tpu_custom_call.1} parent=1 // loop_pre_header
      _
    $region3: #{tpu_custom_call.1} parent=1 // loop_header
      %s32 = sphi 0, %s36
      %p33 = scmp.ge.s32.totalorder %s32, 6
      %s39 = sphi 0, %s51
      %s40 = sphi 0, %s47
      %s41 = sphi 0, %s39
      %s42 = sphi 0, %s40
      %s43 = sphi 0, %s41
      %s44 = sphi 0, %s42
      %s54 = sphi 0, %s56
      %s57 = sphi 0, %s54
      %s58 = sphi 0, %s57
      %s74 = sphi 0, %s58
      %s84 = sphi 0, %s86
      %s87 = sphi 0, %s84
      %s88 = sphi 0, %s87
      %s104 = sphi 0, %s88
      %s114 = sphi 0, %s116
      %s117 = sphi 0, %s114
      %s118 = sphi 0, %s117
      %s134 = sphi 0, %s118
      %s144 = sphi 0, %s146
      %s147 = sphi 0, %s144
      %s148 = sphi 0, %s147
      %s164 = sphi 0, %s148
      %s172 = sphi 0, %s174
      %s175 = sphi 0, %s172
      %s176 = sphi 0, %s175
      %s192 = sphi 0, %s176
      %s198 = sphi 0, %s200
      %s201 = sphi 0, %s198
      %s202 = sphi 0, %s201
      %s218 = sphi 0, %s202
    $region4: #{tpu_custom_call.1} parent=1 // loop_header_branch
      %35 = sbr.rel (%p33) target = $region8
    $region5: #{tpu_custom_call.1} parent=1 // loop_body
      %s37 = ssub.s32 %s32, 1
      %s38 = ssub.s32 %s32, 2
      %s45 = sadd.s32 1, %s40
      %p46 = scmp.ge.s32.totalorder %s45, 2
      %s47 = scalar_select %p46, 0, %s45
      %s48 = sadd.s32 1, %s39
      %s49 = scalar_select %p46, %s48, %s39
      %p50 = scmp.ge.s32.totalorder %s49, 2
      %s51 = scalar_select %p50, 0, %s49
      %s52 = ssub.s32 %s39, %s51
      %p53 = scmp.eq.s32.totalorder %s52, 0
      %s55 = sadd.s32 %s54, 1
      %s56 = scalar_select %p53, %s54, %s55
      %p59 = pneg %p53
      %p60 = scmp.eq.s32.totalorder %s32, 3
      %p61 = por %p59, %p60
      %p62 = scmp.ne.s32.totalorder %s54, %s57
      %p63 = scmp.eq.s32.totalorder %s32, 0
      %p64 = por %p62, %p63
      %p65 = scmp.ne.s32.totalorder %s54, %s57
      %p66 = scmp.eq.s32.totalorder %s37, 3
      %p67 = por %p65, %p66
      %p68 = scmp.ne.s32.totalorder %s57, %s58
      %p69 = scmp.eq.s32.totalorder %s37, 0
      %p70 = por %p68, %p69
      %p71 = scmp.ne.s32.totalorder %s57, %s58
      %p72 = scmp.eq.s32.totalorder %s38, 3
      %p73 = por %p71, %p72
      %p75 = scmp.ne.s32.totalorder %s58, %s74
      %p76 = scmp.eq.s32.totalorder %s38, 0
      %p77 = por %p75, %p76
      %s78 = sld [smem:[#allocation4 + %s39]]
      %s79 = sld [smem:[#allocation4 + %s51]]
      %s80 = ssub.s32 %s78, %s79
      %s81 = ssub.s32 %s40, %s47
      %s82 = sor.u32 %s80, %s81
      %p83 = scmp.eq.s32.totalorder %s82, 0
      %s85 = sadd.s32 %s84, 1
      %s86 = scalar_select %p83, %s84, %s85
      %p89 = pneg %p83
      %p90 = scmp.eq.s32.totalorder %s32, 3
      %p91 = por %p89, %p90
      %p92 = scmp.ne.s32.totalorder %s84, %s87
      %p93 = scmp.eq.s32.totalorder %s32, 0
      %p94 = por %p92, %p93
      %p95 = scmp.ne.s32.totalorder %s84, %s87
      %p96 = scmp.eq.s32.totalorder %s37, 3
      %p97 = por %p95, %p96
      %p98 = scmp.ne.s32.totalorder %s87, %s88
      %p99 = scmp.eq.s32.totalorder %s37, 0
      %p100 = por %p98, %p99
      %p101 = scmp.ne.s32.totalorder %s87, %s88
      %p102 = scmp.eq.s32.totalorder %s38, 3
      %p103 = por %p101, %p102
      %p105 = scmp.ne.s32.totalorder %s88, %s104
      %p106 = scmp.eq.s32.totalorder %s38, 0
      %p107 = por %p105, %p106
      %s108 = sld [smem:[#allocation4 + %s39]]
      %s109 = sld [smem:[#allocation4 + %s51]]
      %s110 = ssub.s32 %s108, %s109
      %s111 = ssub.s32 %s40, %s47
      %s112 = sor.u32 %s110, %s111
      %p113 = scmp.eq.s32.totalorder %s112, 0
      %s115 = sadd.s32 %s114, 1
      %s116 = scalar_select %p113, %s114, %s115
      %p119 = pneg %p113
      %p120 = scmp.eq.s32.totalorder %s32, 3
      %p121 = por %p119, %p120
      %p122 = scmp.ne.s32.totalorder %s114, %s117
      %p123 = scmp.eq.s32.totalorder %s32, 0
      %p124 = por %p122, %p123
      %p125 = scmp.ne.s32.totalorder %s114, %s117
      %p126 = scmp.eq.s32.totalorder %s37, 3
      %p127 = por %p125, %p126
      %p128 = scmp.ne.s32.totalorder %s117, %s118
      %p129 = scmp.eq.s32.totalorder %s37, 0
      %p130 = por %p128, %p129
      %p131 = scmp.ne.s32.totalorder %s117, %s118
      %p132 = scmp.eq.s32.totalorder %s38, 3
      %p133 = por %p131, %p132
      %p135 = scmp.ne.s32.totalorder %s118, %s134
      %p136 = scmp.eq.s32.totalorder %s38, 0
      %p137 = por %p135, %p136
      %s138 = sld [smem:[#allocation4 + %s39]]
      %s139 = sld [smem:[#allocation4 + %s51]]
      %s140 = ssub.s32 %s138, %s139
      %s141 = ssub.s32 %s40, %s47
      %s142 = sor.u32 %s140, %s141
      %p143 = scmp.eq.s32.totalorder %s142, 0
      %s145 = sadd.s32 %s144, 1
      %s146 = scalar_select %p143, %s144, %s145
      %p149 = pneg %p143
      %p150 = scmp.eq.s32.totalorder %s32, 3
      %p151 = por %p149, %p150
      %p152 = scmp.ne.s32.totalorder %s144, %s147
      %p153 = scmp.eq.s32.totalorder %s32, 0
      %p154 = por %p152, %p153
      %p155 = scmp.ne.s32.totalorder %s144, %s147
      %p156 = scmp.eq.s32.totalorder %s37, 3
      %p157 = por %p155, %p156
      %p158 = scmp.ne.s32.totalorder %s147, %s148
      %p159 = scmp.eq.s32.totalorder %s37, 0
      %p160 = por %p158, %p159
      %p161 = scmp.ne.s32.totalorder %s147, %s148
      %p162 = scmp.eq.s32.totalorder %s38, 3
      %p163 = por %p161, %p162
      %p165 = scmp.ne.s32.totalorder %s148, %s164
      %p166 = scmp.eq.s32.totalorder %s38, 0
      %p167 = por %p165, %p166
      %s168 = sld [smem:[#allocation4 + %s39]]
      %s169 = sld [smem:[#allocation4 + %s51]]
      %s170 = ssub.s32 %s168, %s169
      %p171 = scmp.eq.s32.totalorder %s170, 0
      %s173 = sadd.s32 %s172, 1
      %s174 = scalar_select %p171, %s172, %s173
      %p177 = pneg %p171
      %p178 = scmp.eq.s32.totalorder %s32, 3
      %p179 = por %p177, %p178
      %p180 = scmp.ne.s32.totalorder %s172, %s175
      %p181 = scmp.eq.s32.totalorder %s32, 0
      %p182 = por %p180, %p181
      %p183 = scmp.ne.s32.totalorder %s172, %s175
      %p184 = scmp.eq.s32.totalorder %s37, 3
      %p185 = por %p183, %p184
      %p186 = scmp.ne.s32.totalorder %s175, %s176
      %p187 = scmp.eq.s32.totalorder %s37, 0
      %p188 = por %p186, %p187
      %p189 = scmp.ne.s32.totalorder %s175, %s176
      %p190 = scmp.eq.s32.totalorder %s38, 3
      %p191 = por %p189, %p190
      %p193 = scmp.ne.s32.totalorder %s176, %s192
      %p194 = scmp.eq.s32.totalorder %s38, 0
      %p195 = por %p193, %p194
      %s196 = ssub.s32 %s39, %s51
      %p197 = scmp.eq.s32.totalorder %s196, 0
      %s199 = sadd.s32 %s198, 1
      %s200 = scalar_select %p197, %s198, %s199
      %p203 = pneg %p197
      %p204 = scmp.eq.s32.totalorder %s32, 3
      %p205 = por %p203, %p204
      %p206 = scmp.ne.s32.totalorder %s198, %s201
      %p207 = scmp.eq.s32.totalorder %s32, 0
      %p208 = por %p206, %p207
      %p209 = scmp.ne.s32.totalorder %s198, %s201
      %p210 = scmp.eq.s32.totalorder %s37, 3
      %p211 = por %p209, %p210
      %p212 = scmp.ne.s32.totalorder %s201, %s202
      %p213 = scmp.eq.s32.totalorder %s37, 0
      %p214 = por %p212, %p213
      %p215 = scmp.ne.s32.totalorder %s201, %s202
      %p216 = scmp.eq.s32.totalorder %s38, 3
      %p217 = por %p215, %p216
      %p219 = scmp.ne.s32.totalorder %s202, %s218
      %p220 = scmp.eq.s32.totalorder %s38, 0
      %p221 = por %p219, %p220
      %p222 = scmp.le.s32.totalorder 1, %s32
      %p223 = scmp.lt.s32.totalorder %s32, 5
      %p224 = pnand %p222, %p223
      %p225 = pneg %p224
      // Predicated region
      $region9: #{tpu_custom_call.1} parent=5 // pred_check
        _
      $region10: #{tpu_custom_call.1} parent=5 // pred_check_branch
        %227 = sbr.rel (%p224) target = $region12
      $region11: #{tpu_custom_call.1} parent=5 // pred_region
        %s228 = ssub.s32 %s32, 1
      $region12: #{tpu_custom_call.1} parent=5 // pred_fallthru
        _
      %p229 = scmp.lt.s32.totalorder %s32, 4
      // Predicated region
      $region13: #{tpu_custom_call.1} parent=5 // pred_check
        %p230 = pneg %p229
      $region14: #{tpu_custom_call.1} parent=5 // pred_check_branch
        %232 = sbr.rel (%p230) target = $region16
      $region15: #{tpu_custom_call.1} parent=5 // pred_region
        // Predicated region
        $region17: #{tpu_custom_call.1} parent=15 // pred_check
          %p233 = pneg %p64
        $region18: #{tpu_custom_call.1} parent=15 // pred_check_branch
          %235 = sbr.rel (%p233) target = $region20
        $region19: #{tpu_custom_call.1} parent=15 // pred_region
          %s236 = sand.u32 %s54, 1
          %s237 = scalar_lea.sflag [#allocation6], %s236
          %s238 = sand.u32 %s54, 1
          %s239 = smul.addr %s238, 128
          %s240 = scalar_lea.vmem [#allocation5], %s239
          %s241 = smul.u32 16, %s39
          %243 = vsyncadd %s237, 0
          %s244 = smul.addr %s241, 8
          %s245 = scalar_lea.hbm %s1, %s244
          %s246 = sshll.u32 %s245, 4
          %s247 = int_to_ptr.hbm [resolvable:$true] %s246
          %s248 = sshll.u32 %s240, 4
          %s249 = int_to_ptr.vmem [resolvable:$true] %s248
          %254 = dma.hbm_to_vmem [thread:$0]  %s247, 2048, %s249, %s237, 128, 128, 8
        $region20: #{tpu_custom_call.1} parent=15 // pred_fallthru
          _
        // Predicated region
        $region21: #{tpu_custom_call.1} parent=15 // pred_check
          %p255 = pneg %p94
        $region22: #{tpu_custom_call.1} parent=15 // pred_check_branch
          %257 = sbr.rel (%p255) target = $region24
        $region23: #{tpu_custom_call.1} parent=15 // pred_region
          %s258 = sand.u32 %s32, 1
          %s259 = scalar_lea.sflag [#allocation9], %s258
          %s260 = sand.u32 %s84, 1
          %s261 = smul.addr %s260, 128
          %s262 = scalar_lea.vmem [#allocation8], %s261
          %s263 = sld [smem:[#allocation4 + %s39]]
          %265 = vsyncadd %s259, 0
          %s266 = smul.addr %s263, 32
          %s267 = sadd.s32 %s40, %s266
          %s268 = smul.addr %s267, 8
          %s269 = scalar_lea.hbm %s2, %s268
          %s270 = sshll.u32 %s269, 4
          %s271 = int_to_ptr.hbm [resolvable:$true] %s270
          %s272 = sshll.u32 %s262, 4
          %s273 = int_to_ptr.vmem [resolvable:$true] %s272
          %278 = dma.hbm_to_vmem [thread:$0]  %s271, 2048, %s273, %s259, 256, 128, 8
        $region24: #{tpu_custom_call.1} parent=15 // pred_fallthru
          _
        // Predicated region
        $region25: #{tpu_custom_call.1} parent=15 // pred_check
          %p279 = pneg %p124
        $region26: #{tpu_custom_call.1} parent=15 // pred_check_branch
          %281 = sbr.rel (%p279) target = $region28
        $region27: #{tpu_custom_call.1} parent=15 // pred_region
          %s282 = sand.u32 %s32, 1
          %s283 = scalar_lea.sflag [#allocation9], %s282
          %s284 = sand.u32 %s114, 1
          %s285 = scalar_lea.vmem [#allocation10], %s284
          %s286 = sld [smem:[#allocation4 + %s39]]
          %288 = vsyncadd %s283, 0
          %s289 = smul.addr %s286, 2
          %s290 = sadd.s32 %s40, %s289
          %s291 = scalar_lea.hbm %s3, %s290
          %s293 = sshll.u32 %s291, 4
          %s294 = int_to_ptr.hbm [resolvable:$true] %s293
          %s295 = sshll.u32 %s285, 4
          %s296 = int_to_ptr.vmem [resolvable:$true] %s295
          %298 = dma.hbm_to_vmem [thread:$0]  %s294, 16, %s296, %s283
        $region28: #{tpu_custom_call.1} parent=15 // pred_fallthru
          _
        // Predicated region
        $region29: #{tpu_custom_call.1} parent=15 // pred_check
          %p299 = pneg %p154
        $region30: #{tpu_custom_call.1} parent=15 // pred_check_branch
          %301 = sbr.rel (%p299) target = $region32
        $region31: #{tpu_custom_call.1} parent=15 // pred_region
          %s302 = sand.u32 %s144, 1
          %s303 = scalar_lea.sflag [#allocation12], %s302
          %s304 = sand.u32 %s144, 1
          %s305 = smul.addr %s304, 128
          %s306 = scalar_lea.vmem [#allocation11], %s305
          %s307 = sld [smem:[#allocation4 + %s39]]
          %s308 = smul.u32 16, %s40
          %310 = vsyncadd %s303, 0
          %s311 = smul.addr %s307, 32
          %s312 = sadd.s32 %s308, %s311
          %s313 = smul.addr %s312, 8
          %s314 = scalar_lea.hbm %s4, %s313
          %s315 = sshll.u32 %s314, 4
          %s316 = int_to_ptr.hbm [resolvable:$true] %s315
          %s317 = sshll.u32 %s306, 4
          %s318 = int_to_ptr.vmem [resolvable:$true] %s317
          %323 = dma.hbm_to_vmem [thread:$0]  %s316, 2048, %s318, %s303, 128, 128, 8
        $region32: #{tpu_custom_call.1} parent=15 // pred_fallthru
          _
        // Predicated region
        $region33: #{tpu_custom_call.1} parent=15 // pred_check
          %p324 = pneg %p182
        $region34: #{tpu_custom_call.1} parent=15 // pred_check_branch
          %326 = sbr.rel (%p324) target = $region36
        $region35: #{tpu_custom_call.1} parent=15 // pred_region
          %s327 = sld [smem:[#allocation4 + %s39]]
          %p328 = scmp.lt.s32.totalorder %s327, 2
          %s329 = scalar_select %p328, %s327, 2
          %s330 = scalar_lea.vmem %s5, %s329
          %s331 = sld [smem:[#allocation4 + %s39]]
        $region36: #{tpu_custom_call.1} parent=15 // pred_fallthru
          _
      $region16: #{tpu_custom_call.1} parent=5 // pred_fallthru
        _
      %p332 = scmp.le.s32.totalorder 1, %s32
      %p333 = scmp.lt.s32.totalorder %s32, 5
      %p334 = pnand %p332, %p333
      %p335 = pneg %p334
      // Predicated region
      $region37: #{tpu_custom_call.1} parent=5 // pred_check
        _
      $region38: #{tpu_custom_call.1} parent=5 // pred_check_branch
        %337 = sbr.rel (%p334) target = $region40
      $region39: #{tpu_custom_call.1} parent=5 // pred_region
        %s338 = ssub.s32 %s32, 1
        %s339 = sand.u32 %s57, 1
        %s340 = scalar_lea.sflag [#allocation6], %s339
        %s341 = sand.u32 %s57, 1
        %s342 = smul.addr %s341, 128
        %s343 = scalar_lea.vmem [#allocation5], %s342
        // Predicated region
        $region41: #{tpu_custom_call.1} parent=39 // pred_check
          %p344 = pneg %p70
        $region42: #{tpu_custom_call.1} parent=39 // pred_check_branch
          %346 = sbr.rel (%p344) target = $region44
        $region43: #{tpu_custom_call.1} parent=39 // pred_region
          %348 = dma.done %s340, 2048
        $region44: #{tpu_custom_call.1} parent=39 // pred_fallthru
          _
        %s349 = sand.u32 %s37, 1
        %s350 = scalar_lea.sflag [#allocation9], %s349
        %s351 = sand.u32 %s87, 1
        %s352 = smul.addr %s351, 128
        %s353 = scalar_lea.vmem [#allocation8], %s352
        // Predicated region
        $region45: #{tpu_custom_call.1} parent=39 // pred_check
          %p354 = pneg %p100
        $region46: #{tpu_custom_call.1} parent=39 // pred_check_branch
          %356 = sbr.rel (%p354) target = $region48
        $region47: #{tpu_custom_call.1} parent=39 // pred_region
          %358 = dma.done %s350, 2048
        $region48: #{tpu_custom_call.1} parent=39 // pred_fallthru
          _
        %s359 = sand.u32 %s37, 1
        %s360 = scalar_lea.sflag [#allocation9], %s359
        %s361 = sand.u32 %s117, 1
        %s362 = scalar_lea.vmem [#allocation10], %s361
        // Predicated region
        $region49: #{tpu_custom_call.1} parent=39 // pred_check
          %p363 = pneg %p130
        $region50: #{tpu_custom_call.1} parent=39 // pred_check_branch
          %365 = sbr.rel (%p363) target = $region52
        $region51: #{tpu_custom_call.1} parent=39 // pred_region
          %367 = dma.done %s360, 16
        $region52: #{tpu_custom_call.1} parent=39 // pred_fallthru
          _
        %s368 = sand.u32 %s147, 1
        %s369 = scalar_lea.sflag [#allocation12], %s368
        %s370 = sand.u32 %s147, 1
        %s371 = smul.addr %s370, 128
        %s372 = scalar_lea.vmem [#allocation11], %s371
        // Predicated region
        $region53: #{tpu_custom_call.1} parent=39 // pred_check
          %p373 = pneg %p160
        $region54: #{tpu_custom_call.1} parent=39 // pred_check_branch
          %375 = sbr.rel (%p373) target = $region56
        $region55: #{tpu_custom_call.1} parent=39 // pred_region
          %377 = dma.done %s369, 2048
        $region56: #{tpu_custom_call.1} parent=39 // pred_fallthru
          _
        %s378 = sand.u32 %s57, 1
        %s379 = scalar_lea.sflag [#allocation6], %s378
        %s380 = sand.u32 %s57, 1
        %s381 = smul.addr %s380, 128
        %s382 = scalar_lea.vmem [#allocation5], %s381
        %p383 = pneg %p70
        %p384 = pneg %p67
        %s385 = sand.u32 %s37, 1
        %s386 = scalar_lea.sflag [#allocation9], %s385
        %s387 = sand.u32 %s87, 1
        %s388 = smul.addr %s387, 128
        %s389 = scalar_lea.vmem [#allocation8], %s388
        %p390 = pneg %p100
        %p391 = pneg %p97
        %s392 = sand.u32 %s37, 1
        %s393 = scalar_lea.sflag [#allocation9], %s392
        %s394 = sand.u32 %s117, 1
        %s395 = scalar_lea.vmem [#allocation10], %s394
        %p396 = pneg %p130
        %p397 = pneg %p127
        %s398 = sand.u32 %s147, 1
        %s399 = scalar_lea.sflag [#allocation12], %s398
        %s400 = sand.u32 %s147, 1
        %s401 = smul.addr %s400, 128
        %s402 = scalar_lea.vmem [#allocation11], %s401
        %p403 = pneg %p160
        %p404 = pneg %p157
        %s405 = sld [smem:[#allocation4 + %s41]]
        %p406 = scmp.lt.s32.totalorder %s405, 2
        %s407 = scalar_select %p406, %s405, 2
        %s408 = scalar_lea.vmem %s5, %s407
        %p409 = pneg %p188
        %p410 = pneg %p185
        %p411 = pneg %p214
        %p412 = pneg %p211
        %s413 = sand.u32 %s201, 1
        %s414 = scalar_lea.sflag [#allocation7], %s413
        %s415 = sand.u32 %s201, 1
        %s416 = smul.addr %s415, 128
        %s417 = scalar_lea.vmem [#allocation13], %s416
        %s418 = smul.u32 16, %s41
        %s419 = sld [smem:[#allocation4 + %s41]]
        %s420 = sld [smem:[#allocation4 + %s41]]
        %s421 = sld [smem:[#allocation4 + %s41]]
        %s422 = smul.u32 16, %s42
        %s423 = sld [smem:[#allocation4 + %s41]]
        %p424 = scmp.lt.s32.totalorder %s423, 2
        %s425 = scalar_select %p424, %s423, 2
        %s426 = scalar_lea.vmem %s5, %s425
        %s427 = sld [smem:[#allocation4 + %s41]]
        %s428 = smul.u32 16, %s41
        %p429 = scmp.eq.s32.totalorder %s42, 0
        // Predicated region
        $region57: #{tpu_custom_call.1} parent=39 // pred_check
          %p430 = pneg %p429
        $region58: #{tpu_custom_call.1} parent=39 // pred_check_branch
          %432 = sbr.rel (%p430) target = $region60
        $region59: #{tpu_custom_call.1} parent=39 // pred_region
          %433 = vst [vmem:[#allocation2] sm:$0xff] 0.0
          %434 = vst [vmem:[#allocation2 + $0x8] sm:$0xff] 0.0
          %435 = vst [vmem:[#allocation2 + $0x10] sm:$0xff] 0.0
          %436 = vst [vmem:[#allocation2 + $0x18] sm:$0xff] 0.0
          %437 = vst [vmem:[#allocation2 + $0x20] sm:$0xff] 0.0
          %438 = vst [vmem:[#allocation2 + $0x28] sm:$0xff] 0.0
          %439 = vst [vmem:[#allocation2 + $0x30] sm:$0xff] 0.0
          %440 = vst [vmem:[#allocation2 + $0x38] sm:$0xff] 0.0
          %441 = vst [vmem:[#allocation2 + $0x40] sm:$0xff] 0.0
          %442 = vst [vmem:[#allocation2 + $0x48] sm:$0xff] 0.0
          %443 = vst [vmem:[#allocation2 + $0x50] sm:$0xff] 0.0
          %444 = vst [vmem:[#allocation2 + $0x58] sm:$0xff] 0.0
          %445 = vst [vmem:[#allocation2 + $0x60] sm:$0xff] 0.0
          %446 = vst [vmem:[#allocation2 + $0x68] sm:$0xff] 0.0
          %447 = vst [vmem:[#allocation2 + $0x70] sm:$0xff] 0.0
          %448 = vst [vmem:[#allocation2 + $0x78] sm:$0xff] 0.0
        $region60: #{tpu_custom_call.1} parent=39 // pred_fallthru
          _
        %v449 = vld [vmem:[%s343] sm:$0xff]
        %v450 = vld [vmem:[%s343 + $0x8] sm:$0xff]
        %v451 = vld [vmem:[%s343 + $0x10] sm:$0xff]
        %v452 = vld [vmem:[%s343 + $0x18] sm:$0xff]
        %v453 = vld [vmem:[%s343 + $0x20] sm:$0xff]
        %v454 = vld [vmem:[%s343 + $0x28] sm:$0xff]
        %v455 = vld [vmem:[%s343 + $0x30] sm:$0xff]
        %v456 = vld [vmem:[%s343 + $0x38] sm:$0xff]
        %v457 = vld [vmem:[%s343 + $0x40] sm:$0xff]
        %v458 = vld [vmem:[%s343 + $0x48] sm:$0xff]
        %v459 = vld [vmem:[%s343 + $0x50] sm:$0xff]
        %v460 = vld [vmem:[%s343 + $0x58] sm:$0xff]
        %v461 = vld [vmem:[%s343 + $0x60] sm:$0xff]
        %v462 = vld [vmem:[%s343 + $0x68] sm:$0xff]
        %v463 = vld [vmem:[%s343 + $0x70] sm:$0xff]
        %v464 = vld [vmem:[%s343 + $0x78] sm:$0xff]
        %v465 = vld [vmem:[%s353] sm:$0xff]
        %v466 = vld [vmem:[%s353 + $0x8] sm:$0xff]
        %v467 = vld [vmem:[%s353 + $0x10] sm:$0xff]
        %v468 = vld [vmem:[%s353 + $0x18] sm:$0xff]
        %v469 = vld [vmem:[%s353 + $0x20] sm:$0xff]
        %v470 = vld [vmem:[%s353 + $0x28] sm:$0xff]
        %v471 = vld [vmem:[%s353 + $0x30] sm:$0xff]
        %v472 = vld [vmem:[%s353 + $0x38] sm:$0xff]
        %v473 = vld [vmem:[%s353 + $0x40] sm:$0xff]
        %v474 = vld [vmem:[%s353 + $0x48] sm:$0xff]
        %v475 = vld [vmem:[%s353 + $0x50] sm:$0xff]
        %v476 = vld [vmem:[%s353 + $0x58] sm:$0xff]
        %v477 = vld [vmem:[%s353 + $0x60] sm:$0xff]
        %v478 = vld [vmem:[%s353 + $0x68] sm:$0xff]
        %v479 = vld [vmem:[%s353 + $0x70] sm:$0xff]
        %v480 = vld [vmem:[%s353 + $0x78] sm:$0xff]
        %v481 = vld [vmem:[%s372] sm:$0xff]
        %v482 = vld [vmem:[%s372 + $0x8] sm:$0xff]
        %v483 = vld [vmem:[%s372 + $0x10] sm:$0xff]
        %v484 = vld [vmem:[%s372 + $0x18] sm:$0xff]
        %v485 = vld [vmem:[%s372 + $0x20] sm:$0xff]
        %v486 = vld [vmem:[%s372 + $0x28] sm:$0xff]
        %v487 = vld [vmem:[%s372 + $0x30] sm:$0xff]
        %v488 = vld [vmem:[%s372 + $0x38] sm:$0xff]
        %v489 = vld [vmem:[%s372 + $0x40] sm:$0xff]
        %v490 = vld [vmem:[%s372 + $0x48] sm:$0xff]
        %v491 = vld [vmem:[%s372 + $0x50] sm:$0xff]
        %v492 = vld [vmem:[%s372 + $0x58] sm:$0xff]
        %v493 = vld [vmem:[%s372 + $0x60] sm:$0xff]
        %v494 = vld [vmem:[%s372 + $0x68] sm:$0xff]
        %v495 = vld [vmem:[%s372 + $0x70] sm:$0xff]
        %v496 = vld [vmem:[%s372 + $0x78] sm:$0xff]
        %v497 = vld [vmem:[%s362] sm:$0x1]
        %v499 = vperm.slane %v497, 0
        %501 = vmatpush.msra.mxu0 %v480
        %502 = vmatpush.msra.mxu0 %v479
        %503 = vmatpush.msra.mxu0 %v478
        %504 = vmatpush.msra.mxu0 %v477
        %505 = vmatpush.msra.mxu0 %v476
        %506 = vmatpush.msra.mxu0 %v475
        %507 = vmatpush.msra.mxu0 %v474
        %508 = vmatpush.msra.mxu0 %v473
        %509 = vmatpush.msra.mxu0 %v472
        %510 = vmatpush.msra.mxu0 %v471
        %511 = vmatpush.msra.mxu0 %v470
        %512 = vmatpush.msra.mxu0 %v469
        %513 = vmatpush.msra.mxu0 %v468
        %514 = vmatpush.msra.mxu0 %v467
        %515 = vmatpush.msra.mxu0 %v466
        %516 = vmatpush.msra.mxu0 %v465
        %517 = vmatmul.f32.gmra.mxu0 %v449
        %v518 = vpop.f32.mrf.mxu0
        %v519 = vadd.f32 %v499, %v518
        %520 = vmatmul.f32.gmra.mxu0 %v450
        %v521 = vpop.f32.mrf.mxu0
        %v522 = vadd.f32 %v499, %v521
        %523 = vmatmul.f32.gmra.mxu0 %v451
        %v524 = vpop.f32.mrf.mxu0
        %v525 = vadd.f32 %v499, %v524
        %526 = vmatmul.f32.gmra.mxu0 %v452
        %v527 = vpop.f32.mrf.mxu0
        %v528 = vadd.f32 %v499, %v527
        %529 = vmatmul.f32.gmra.mxu0 %v453
        %v530 = vpop.f32.mrf.mxu0
        %v531 = vadd.f32 %v499, %v530
        %532 = vmatmul.f32.gmra.mxu0 %v454
        %v533 = vpop.f32.mrf.mxu0
        %v534 = vadd.f32 %v499, %v533
        %535 = vmatmul.f32.gmra.mxu0 %v455
        %v536 = vpop.f32.mrf.mxu0
        %v537 = vadd.f32 %v499, %v536
        %538 = vmatmul.f32.gmra.mxu0 %v456
        %v539 = vpop.f32.mrf.mxu0
        %v540 = vadd.f32 %v499, %v539
        %541 = vmatmul.f32.gmra.mxu0 %v457
        %v542 = vpop.f32.mrf.mxu0
        %v543 = vadd.f32 %v499, %v542
        %544 = vmatmul.f32.gmra.mxu0 %v458
        %v545 = vpop.f32.mrf.mxu0
        %v546 = vadd.f32 %v499, %v545
        %547 = vmatmul.f32.gmra.mxu0 %v459
        %v548 = vpop.f32.mrf.mxu0
        %v549 = vadd.f32 %v499, %v548
        %550 = vmatmul.f32.gmra.mxu0 %v460
        %v551 = vpop.f32.mrf.mxu0
        %v552 = vadd.f32 %v499, %v551
        %553 = vmatmul.f32.gmra.mxu0 %v461
        %v554 = vpop.f32.mrf.mxu0
        %v555 = vadd.f32 %v499, %v554
        %556 = vmatmul.f32.gmra.mxu0 %v462
        %v557 = vpop.f32.mrf.mxu0
        %v558 = vadd.f32 %v499, %v557
        %559 = vmatmul.f32.gmra.mxu0 %v463
        %v560 = vpop.f32.mrf.mxu0
        %v561 = vadd.f32 %v499, %v560
        %562 = vmatmul.f32.gmra.mxu0 %v464
        %v563 = vpop.f32.mrf.mxu0
        %v564 = vadd.f32 %v499, %v563
        %565 = vdwg.mxu0
        %v566 = vmul.f32 %v519, %v519
        %v567 = vmul.f32 %v522, %v522
        %v568 = vmul.f32 %v525, %v525
        %v569 = vmul.f32 %v528, %v528
        %v570 = vmul.f32 %v531, %v531
        %v571 = vmul.f32 %v534, %v534
        %v572 = vmul.f32 %v537, %v537
        %v573 = vmul.f32 %v540, %v540
        %v574 = vmul.f32 %v543, %v543
        %v575 = vmul.f32 %v546, %v546
        %v576 = vmul.f32 %v549, %v549
        %v577 = vmul.f32 %v552, %v552
        %v578 = vmul.f32 %v555, %v555
        %v579 = vmul.f32 %v558, %v558
        %v580 = vmul.f32 %v561, %v561
        %v581 = vmul.f32 %v564, %v564
        %v582 = vmul.f32 %v519, %v566
        %v583 = vmul.f32 %v522, %v567
        %v584 = vmul.f32 %v525, %v568
        %v585 = vmul.f32 %v528, %v569
        %v586 = vmul.f32 %v531, %v570
        %v587 = vmul.f32 %v534, %v571
        %v588 = vmul.f32 %v537, %v572
        %v589 = vmul.f32 %v540, %v573
        %v590 = vmul.f32 %v543, %v574
        %v591 = vmul.f32 %v546, %v575
        %v592 = vmul.f32 %v549, %v576
        %v593 = vmul.f32 %v552, %v577
        %v594 = vmul.f32 %v555, %v578
        %v595 = vmul.f32 %v558, %v579
        %v596 = vmul.f32 %v561, %v580
        %v597 = vmul.f32 %v564, %v581
        %v598 = vmul.f32 %v582, 0.044715
        %v599 = vmul.f32 %v583, 0.044715
        %v600 = vmul.f32 %v584, 0.044715
        %v601 = vmul.f32 %v585, 0.044715
        %v602 = vmul.f32 %v586, 0.044715
        %v603 = vmul.f32 %v587, 0.044715
        %v604 = vmul.f32 %v588, 0.044715
        %v605 = vmul.f32 %v589, 0.044715
        %v606 = vmul.f32 %v590, 0.044715
        %v607 = vmul.f32 %v591, 0.044715
        %v608 = vmul.f32 %v592, 0.044715
        %v609 = vmul.f32 %v593, 0.044715
        %v610 = vmul.f32 %v594, 0.044715
        %v611 = vmul.f32 %v595, 0.044715
        %v612 = vmul.f32 %v596, 0.044715
        %v613 = vmul.f32 %v597, 0.044715
        %v614 = vadd.f32 %v519, %v598
        %v615 = vadd.f32 %v522, %v599
        %v616 = vadd.f32 %v525, %v600
        %v617 = vadd.f32 %v528, %v601
        %v618 = vadd.f32 %v531, %v602
        %v619 = vadd.f32 %v534, %v603
        %v620 = vadd.f32 %v537, %v604
        %v621 = vadd.f32 %v540, %v605
        %v622 = vadd.f32 %v543, %v606
        %v623 = vadd.f32 %v546, %v607
        %v624 = vadd.f32 %v549, %v608
        %v625 = vadd.f32 %v552, %v609
        %v626 = vadd.f32 %v555, %v610
        %v627 = vadd.f32 %v558, %v611
        %v628 = vadd.f32 %v561, %v612
        %v629 = vadd.f32 %v564, %v613
        %v630 = vmul.f32 %v614, 0.7978846
        %v631 = vmul.f32 %v615, 0.7978846
        %v632 = vmul.f32 %v616, 0.7978846
        %v633 = vmul.f32 %v617, 0.7978846
        %v634 = vmul.f32 %v618, 0.7978846
        %v635 = vmul.f32 %v619, 0.7978846
        %v636 = vmul.f32 %v620, 0.7978846
        %v637 = vmul.f32 %v621, 0.7978846
        %v638 = vmul.f32 %v622, 0.7978846
        %v639 = vmul.f32 %v623, 0.7978846
        %v640 = vmul.f32 %v624, 0.7978846
        %v641 = vmul.f32 %v625, 0.7978846
        %v642 = vmul.f32 %v626, 0.7978846
        %v643 = vmul.f32 %v627, 0.7978846
        %v644 = vmul.f32 %v628, 0.7978846
        %v645 = vmul.f32 %v629, 0.7978846
        %v646 = vtanh.pop %v630
        %v647 = vtanh.pop %v631
        %v648 = vtanh.pop %v632
        %v649 = vtanh.pop %v633
        %v650 = vtanh.pop %v634
        %v651 = vtanh.pop %v635
        %v652 = vtanh.pop %v636
        %v653 = vtanh.pop %v637
        %v654 = vtanh.pop %v638
        %v655 = vtanh.pop %v639
        %v656 = vtanh.pop %v640
        %v657 = vtanh.pop %v641
        %v658 = vtanh.pop %v642
        %v659 = vtanh.pop %v643
        %v660 = vtanh.pop %v644
        %v661 = vtanh.pop %v645
        %v662 = vadd.f32 %v646, 1.0
        %v663 = vadd.f32 %v647, 1.0
        %v664 = vadd.f32 %v648, 1.0
        %v665 = vadd.f32 %v649, 1.0
        %v666 = vadd.f32 %v650, 1.0
        %v667 = vadd.f32 %v651, 1.0
        %v668 = vadd.f32 %v652, 1.0
        %v669 = vadd.f32 %v653, 1.0
        %v670 = vadd.f32 %v654, 1.0
        %v671 = vadd.f32 %v655, 1.0
        %v672 = vadd.f32 %v656, 1.0
        %v673 = vadd.f32 %v657, 1.0
        %v674 = vadd.f32 %v658, 1.0
        %v675 = vadd.f32 %v659, 1.0
        %v676 = vadd.f32 %v660, 1.0
        %v677 = vadd.f32 %v661, 1.0
        %v678 = vmul.f32 %v662, 0.5
        %v679 = vmul.f32 %v663, 0.5
        %v680 = vmul.f32 %v664, 0.5
        %v681 = vmul.f32 %v665, 0.5
        %v682 = vmul.f32 %v666, 0.5
        %v683 = vmul.f32 %v667, 0.5
        %v684 = vmul.f32 %v668, 0.5
        %v685 = vmul.f32 %v669, 0.5
        %v686 = vmul.f32 %v670, 0.5
        %v687 = vmul.f32 %v671, 0.5
        %v688 = vmul.f32 %v672, 0.5
        %v689 = vmul.f32 %v673, 0.5
        %v690 = vmul.f32 %v674, 0.5
        %v691 = vmul.f32 %v675, 0.5
        %v692 = vmul.f32 %v676, 0.5
        %v693 = vmul.f32 %v677, 0.5
        %v694 = vmul.f32 %v519, %v678
        %v695 = vmul.f32 %v522, %v679
        %v696 = vmul.f32 %v525, %v680
        %v697 = vmul.f32 %v528, %v681
        %v698 = vmul.f32 %v531, %v682
        %v699 = vmul.f32 %v534, %v683
        %v700 = vmul.f32 %v537, %v684
        %v701 = vmul.f32 %v540, %v685
        %v702 = vmul.f32 %v543, %v686
        %v703 = vmul.f32 %v546, %v687
        %v704 = vmul.f32 %v549, %v688
        %v705 = vmul.f32 %v552, %v689
        %v706 = vmul.f32 %v555, %v690
        %v707 = vmul.f32 %v558, %v691
        %v708 = vmul.f32 %v561, %v692
        %v709 = vmul.f32 %v564, %v693
        %v710 = vld [vmem:[#allocation2] sm:$0xff]
        %v711 = vld [vmem:[#allocation2 + $0x8] sm:$0xff]
        %v712 = vld [vmem:[#allocation2 + $0x10] sm:$0xff]
        %v713 = vld [vmem:[#allocation2 + $0x18] sm:$0xff]
        %v714 = vld [vmem:[#allocation2 + $0x20] sm:$0xff]
        %v715 = vld [vmem:[#allocation2 + $0x28] sm:$0xff]
        %v716 = vld [vmem:[#allocation2 + $0x30] sm:$0xff]
        %v717 = vld [vmem:[#allocation2 + $0x38] sm:$0xff]
        %v718 = vld [vmem:[#allocation2 + $0x40] sm:$0xff]
        %v719 = vld [vmem:[#allocation2 + $0x48] sm:$0xff]
        %v720 = vld [vmem:[#allocation2 + $0x50] sm:$0xff]
        %v721 = vld [vmem:[#allocation2 + $0x58] sm:$0xff]
        %v722 = vld [vmem:[#allocation2 + $0x60] sm:$0xff]
        %v723 = vld [vmem:[#allocation2 + $0x68] sm:$0xff]
        %v724 = vld [vmem:[#allocation2 + $0x70] sm:$0xff]
        %v725 = vld [vmem:[#allocation2 + $0x78] sm:$0xff]
        %726 = vmatpush.msra.mxu0 %v496
        %727 = vmatpush.msra.mxu0 %v495
        %728 = vmatpush.msra.mxu0 %v494
        %729 = vmatpush.msra.mxu0 %v493
        %730 = vmatpush.msra.mxu0 %v492
        %731 = vmatpush.msra.mxu0 %v491
        %732 = vmatpush.msra.mxu0 %v490
        %733 = vmatpush.msra.mxu0 %v489
        %734 = vmatpush.msra.mxu0 %v488
        %735 = vmatpush.msra.mxu0 %v487
        %736 = vmatpush.msra.mxu0 %v486
        %737 = vmatpush.msra.mxu0 %v485
        %738 = vmatpush.msra.mxu0 %v484
        %739 = vmatpush.msra.mxu0 %v483
        %740 = vmatpush.msra.mxu0 %v482
        %741 = vmatpush.msra.mxu0 %v481
        %742 = vmatmul.f32.gmra.mxu0 %v694
        %v743 = vpop.f32.mrf.mxu0
        %v744 = vadd.f32 0.0, %v743
        %745 = vmatmul.f32.gmra.mxu0 %v695
        %v746 = vpop.f32.mrf.mxu0
        %v747 = vadd.f32 0.0, %v746
        %748 = vmatmul.f32.gmra.mxu0 %v696
        %v749 = vpop.f32.mrf.mxu0
        %v750 = vadd.f32 0.0, %v749
        %751 = vmatmul.f32.gmra.mxu0 %v697
        %v752 = vpop.f32.mrf.mxu0
        %v753 = vadd.f32 0.0, %v752
        %754 = vmatmul.f32.gmra.mxu0 %v698
        %v755 = vpop.f32.mrf.mxu0
        %v756 = vadd.f32 0.0, %v755
        %757 = vmatmul.f32.gmra.mxu0 %v699
        %v758 = vpop.f32.mrf.mxu0
        %v759 = vadd.f32 0.0, %v758
        %760 = vmatmul.f32.gmra.mxu0 %v700
        %v761 = vpop.f32.mrf.mxu0
        %v762 = vadd.f32 0.0, %v761
        %763 = vmatmul.f32.gmra.mxu0 %v701
        %v764 = vpop.f32.mrf.mxu0
        %v765 = vadd.f32 0.0, %v764
        %766 = vmatmul.f32.gmra.mxu0 %v702
        %v767 = vpop.f32.mrf.mxu0
        %v768 = vadd.f32 0.0, %v767
        %769 = vmatmul.f32.gmra.mxu0 %v703
        %v770 = vpop.f32.mrf.mxu0
        %v771 = vadd.f32 0.0, %v770
        %772 = vmatmul.f32.gmra.mxu0 %v704
        %v773 = vpop.f32.mrf.mxu0
        %v774 = vadd.f32 0.0, %v773
        %775 = vmatmul.f32.gmra.mxu0 %v705
        %v776 = vpop.f32.mrf.mxu0
        %v777 = vadd.f32 0.0, %v776
        %778 = vmatmul.f32.gmra.mxu0 %v706
        %v779 = vpop.f32.mrf.mxu0
        %v780 = vadd.f32 0.0, %v779
        %781 = vmatmul.f32.gmra.mxu0 %v707
        %v782 = vpop.f32.mrf.mxu0
        %v783 = vadd.f32 0.0, %v782
        %784 = vmatmul.f32.gmra.mxu0 %v708
        %v785 = vpop.f32.mrf.mxu0
        %v786 = vadd.f32 0.0, %v785
        %787 = vmatmul.f32.gmra.mxu0 %v709
        %v788 = vpop.f32.mrf.mxu0
        %v789 = vadd.f32 0.0, %v788
        %790 = vdwg.mxu0
        %v791 = vadd.f32 %v710, %v744
        %v792 = vadd.f32 %v711, %v747
        %v793 = vadd.f32 %v712, %v750
        %v794 = vadd.f32 %v713, %v753
        %v795 = vadd.f32 %v714, %v756
        %v796 = vadd.f32 %v715, %v759
        %v797 = vadd.f32 %v716, %v762
        %v798 = vadd.f32 %v717, %v765
        %v799 = vadd.f32 %v718, %v768
        %v800 = vadd.f32 %v719, %v771
        %v801 = vadd.f32 %v720, %v774
        %v802 = vadd.f32 %v721, %v777
        %v803 = vadd.f32 %v722, %v780
        %v804 = vadd.f32 %v723, %v783
        %v805 = vadd.f32 %v724, %v786
        %v806 = vadd.f32 %v725, %v789
        %807 = vst [vmem:[#allocation2] sm:$0xff] %v791
        %808 = vst [vmem:[#allocation2 + $0x8] sm:$0xff] %v792
        %809 = vst [vmem:[#allocation2 + $0x10] sm:$0xff] %v793
        %810 = vst [vmem:[#allocation2 + $0x18] sm:$0xff] %v794
        %811 = vst [vmem:[#allocation2 + $0x20] sm:$0xff] %v795
        %812 = vst [vmem:[#allocation2 + $0x28] sm:$0xff] %v796
        %813 = vst [vmem:[#allocation2 + $0x30] sm:$0xff] %v797
        %814 = vst [vmem:[#allocation2 + $0x38] sm:$0xff] %v798
        %815 = vst [vmem:[#allocation2 + $0x40] sm:$0xff] %v799
        %816 = vst [vmem:[#allocation2 + $0x48] sm:$0xff] %v800
        %817 = vst [vmem:[#allocation2 + $0x50] sm:$0xff] %v801
        %818 = vst [vmem:[#allocation2 + $0x58] sm:$0xff] %v802
        %819 = vst [vmem:[#allocation2 + $0x60] sm:$0xff] %v803
        %820 = vst [vmem:[#allocation2 + $0x68] sm:$0xff] %v804
        %821 = vst [vmem:[#allocation2 + $0x70] sm:$0xff] %v805
        %822 = vst [vmem:[#allocation2 + $0x78] sm:$0xff] %v806
        %p823 = scmp.eq.s32.totalorder %s42, 1
        // Predicated region
        $region61: #{tpu_custom_call.1} parent=39 // pred_check
          %p824 = pneg %p823
        $region62: #{tpu_custom_call.1} parent=39 // pred_check_branch
          %826 = sbr.rel (%p824) target = $region64
        $region63: #{tpu_custom_call.1} parent=39 // pred_region
          %v827 = vld [vmem:[#allocation2] sm:$0xff]
          %v828 = vld [vmem:[#allocation2 + $0x8] sm:$0xff]
          %v829 = vld [vmem:[#allocation2 + $0x10] sm:$0xff]
          %v830 = vld [vmem:[#allocation2 + $0x18] sm:$0xff]
          %v831 = vld [vmem:[#allocation2 + $0x20] sm:$0xff]
          %v832 = vld [vmem:[#allocation2 + $0x28] sm:$0xff]
          %v833 = vld [vmem:[#allocation2 + $0x30] sm:$0xff]
          %v834 = vld [vmem:[#allocation2 + $0x38] sm:$0xff]
          %v835 = vld [vmem:[#allocation2 + $0x40] sm:$0xff]
          %v836 = vld [vmem:[#allocation2 + $0x48] sm:$0xff]
          %v837 = vld [vmem:[#allocation2 + $0x50] sm:$0xff]
          %v838 = vld [vmem:[#allocation2 + $0x58] sm:$0xff]
          %v839 = vld [vmem:[#allocation2 + $0x60] sm:$0xff]
          %v840 = vld [vmem:[#allocation2 + $0x68] sm:$0xff]
          %v841 = vld [vmem:[#allocation2 + $0x70] sm:$0xff]
          %v842 = vld [vmem:[#allocation2 + $0x78] sm:$0xff]
          %v843 = vld [vmem:[%s426] sm:$0x1]
          %v845 = vperm.slane %v843, 0
          %v847 = vadd.f32 %v827, %v845
          %v848 = vadd.f32 %v828, %v845
          %v849 = vadd.f32 %v829, %v845
          %v850 = vadd.f32 %v830, %v845
          %v851 = vadd.f32 %v831, %v845
          %v852 = vadd.f32 %v832, %v845
          %v853 = vadd.f32 %v833, %v845
          %v854 = vadd.f32 %v834, %v845
          %v855 = vadd.f32 %v835, %v845
          %v856 = vadd.f32 %v836, %v845
          %v857 = vadd.f32 %v837, %v845
          %v858 = vadd.f32 %v838, %v845
          %v859 = vadd.f32 %v839, %v845
          %v860 = vadd.f32 %v840, %v845
          %v861 = vadd.f32 %v841, %v845
          %v862 = vadd.f32 %v842, %v845
          %863 = vst [vmem:[%s417] sm:$0xff] %v847
          %864 = vst [vmem:[%s417 + $0x8] sm:$0xff] %v848
          %865 = vst [vmem:[%s417 + $0x10] sm:$0xff] %v849
          %866 = vst [vmem:[%s417 + $0x18] sm:$0xff] %v850
          %867 = vst [vmem:[%s417 + $0x20] sm:$0xff] %v851
          %868 = vst [vmem:[%s417 + $0x28] sm:$0xff] %v852
          %869 = vst [vmem:[%s417 + $0x30] sm:$0xff] %v853
          %870 = vst [vmem:[%s417 + $0x38] sm:$0xff] %v854
          %871 = vst [vmem:[%s417 + $0x40] sm:$0xff] %v855
          %872 = vst [vmem:[%s417 + $0x48] sm:$0xff] %v856
          %873 = vst [vmem:[%s417 + $0x50] sm:$0xff] %v857
          %874 = vst [vmem:[%s417 + $0x58] sm:$0xff] %v858
          %875 = vst [vmem:[%s417 + $0x60] sm:$0xff] %v859
          %876 = vst [vmem:[%s417 + $0x68] sm:$0xff] %v860
          %877 = vst [vmem:[%s417 + $0x70] sm:$0xff] %v861
          %878 = vst [vmem:[%s417 + $0x78] sm:$0xff] %v862
        $region64: #{tpu_custom_call.1} parent=39 // pred_fallthru
          _
        %s879 = sand.u32 %s201, 1
        %s880 = scalar_lea.sflag [#allocation7], %s879
        %s881 = sand.u32 %s201, 1
        %s882 = smul.addr %s881, 128
        %s883 = scalar_lea.vmem [#allocation13], %s882
        // Predicated region
        $region65: #{tpu_custom_call.1} parent=39 // pred_check
          %p884 = pneg %p211
        $region66: #{tpu_custom_call.1} parent=39 // pred_check_branch
          %886 = sbr.rel (%p884) target = $region68
        $region67: #{tpu_custom_call.1} parent=39 // pred_region
          %s887 = smul.u32 16, %s41
          %889 = vsyncadd %s880, 0
          %s890 = smul.addr %s887, 8
          %s891 = scalar_lea.hbm %s6, %s890
          %s892 = sshll.u32 %s883, 4
          %s893 = int_to_ptr.vmem [resolvable:$true] %s892
          %s894 = sshll.u32 %s891, 4
          %s895 = int_to_ptr.hbm [resolvable:$true] %s894
          %900 = dma.vmem_to_hbm [thread:$0]  %s893, 2048, %s895, %s880, 128, 128, 8
        $region68: #{tpu_custom_call.1} parent=39 // pred_fallthru
          _
      $region40: #{tpu_custom_call.1} parent=5 // pred_fallthru
        _
      %p901 = scmp.le.s32.totalorder 2, %s32
      // Predicated region
      $region69: #{tpu_custom_call.1} parent=5 // pred_check
        %p902 = pneg %p901
      $region70: #{tpu_custom_call.1} parent=5 // pred_check_branch
        %904 = sbr.rel (%p902) target = $region72
      $region71: #{tpu_custom_call.1} parent=5 // pred_region
        %s905 = ssub.s32 %s32, 2
        // Predicated region
        $region73: #{tpu_custom_call.1} parent=71 // pred_check
          %p906 = pneg %p217
        $region74: #{tpu_custom_call.1} parent=71 // pred_check_branch
          %908 = sbr.rel (%p906) target = $region76
        $region75: #{tpu_custom_call.1} parent=71 // pred_region
          %s909 = sand.u32 %s202, 1
          %s910 = scalar_lea.sflag [#allocation7], %s909
          %s911 = sand.u32 %s202, 1
          %s912 = smul.addr %s911, 128
          %s913 = scalar_lea.vmem [#allocation13], %s912
          %915 = dma.done %s910, 2048
        $region76: #{tpu_custom_call.1} parent=71 // pred_fallthru
          _
      $region72: #{tpu_custom_call.1} parent=5 // pred_fallthru
        _
    $region6: #{tpu_custom_call.1} parent=1 // loop_footer
      %s36 = sadd.s32 1, %s32
    $region7: #{tpu_custom_call.1} parent=1 // loop_footer_branch
      %31 = sbr.rel target = $region3
    $region8: #{tpu_custom_call.1} parent=1 // loop_exit
      _
    %916 = vsyncpa [#allocation6], 1
    %s917 = scalar_lea.sflag [#allocation6], 1
    %918 = vsyncpa %s917, 1
    %919 = vsyncpa [#allocation9], 1
    %s920 = scalar_lea.sflag [#allocation9], 1
    %921 = vsyncpa %s920, 1
    %922 = vsyncpa [#allocation12], 1
    %s923 = scalar_lea.sflag [#allocation12], 1
    %924 = vsyncpa %s923, 1
    %925 = vsyncpa [#allocation7], 1
    %s926 = scalar_lea.sflag [#allocation7], 1
    %927 = vsyncpa %s926, 1

</llo_original>
